<compile_context>
chip_gen: v5e
topology: v5e:2x2
jax: 0.10.0
libtpu: 0.0.40
codegen_flags: <defaults>
</compile_context>

<pallas_src>
import functools

import jax
import jax.numpy as jnp
from jax import lax
from jax.experimental import pallas as pl
from jax.experimental.pallas import tpu as pltpu


def _wrn_block_kernel(W,
                      x_ref, m_ref, bn1_ref, w1_ref, ocp_ref, w2_ref,
                      o_ref,
                      slab1_ref, slab2_ref):
    """Fused WRN block for one batch element, (C, H*W) layout (spatial on lanes)."""
    Cin = x_ref.shape[1]
    Cout = o_ref.shape[1]
    HW = x_ref.shape[2]

    x = x_ref[0]                                                   # (Cin, HW) f32

    # ---- Stage 1: BN1 + ReLU on the whole plane (f32 VPU pass). ----
    a1 = jnp.maximum(x * bn1_ref[0] + bn1_ref[1], 0.0)             # (Cin, HW)

    def stage_taps(a, C, slab_ref):
        """Write the 9 'same'-padded tap planes of `a` into a (9*C, HW) bf16 slab.

        Padding is realized with a static lane roll plus a precomputed 0/1
        validity mask per tap (no padded buffer, no zero-fill stores)."""
        for dy in range(3):
            for dx in range(3):
                t = 3 * dy + dx
                off = (dy - 1) * W + (dx - 1)                      # static
                if off == 0:
                    plane = a                                      # center tap
                else:
                    shift = (-off) % HW                            # static
                    # roll moves element p+off to position p; the mask zeroes
                    # destinations whose source falls outside the image.
                    plane = pltpu.roll(a, shift, axis=1) * m_ref[t]
                slab_ref[pl.ds(t * C, C), :] = plane.astype(slab_ref.dtype)

    # ---- Stage 2: conv3x3 #1 as ONE deep-K matmul (BN2 scale pre-folded into
    #      the weights in the wrapper), then shift + ReLU. ----
    stage_taps(a1, Cin, slab1_ref)                                 # (9*Cin, HW) bf16
    y1 = jnp.dot(w1_ref[...], slab1_ref[...],
                 preferred_element_type=jnp.float32)               # (Cout, HW)
    a2 = jnp.maximum(y1 + ocp_ref[0], 0.0)                         # shift = s2*b1 + t2

    # ---- Stage 3: conv3x3 #2 with the 1x1 shortcut fused into the same
    #      matmul (K = 9*Cout + Cin), single merged bias (b2 + b11). ----
    stage_taps(a2, Cout, slab2_ref)                                # rows [0, 9*Cout)
    slab2_ref[pl.ds(9 * Cout, Cin), :] = x.astype(slab2_ref.dtype) # shortcut input
    y2 = jnp.dot(w2_ref[...], slab2_ref[...],
                 preferred_element_type=jnp.float32)               # (Cout, HW)

    o_ref[0] = (y2 + ocp_ref[1]).astype(o_ref.dtype)               # lane-dense store


def wrn_block_forward(x_nchw, params):
    """Wrapper: NCHW in / NCHW out (PyTorch convention)."""
    (s1, t1, w1, b1, s2, t2, w2, b2, w11, b11) = params
    N, Cin, H, W = x_nchw.shape
    Cout = b1.shape[0]
    HW = H * W

    x = x_nchw.reshape(N, Cin, HW).astype(jnp.float32)             # (N, Cin, HW)

    # --- One-time constant folding / packing (XLA glue, outside the kernel). ---
    # Pack BN1 scale/shift into one slab.
    bn1 = jnp.stack([s1, t1]).reshape(2, Cin, 1).astype(jnp.float32)
    # Fold BN2 into conv #1:  relu(s2*(w1*a1 + b1) + t2) == relu((s2.*w1)*a1 + (s2*b1+t2)).
    shift1 = s2 * b1 + t2
    # Merge conv #2 bias with the 1x1 shortcut bias (added once after the fused matmul).
    bias_out = b2 + b11
    ocp = jnp.stack([shift1, bias_out]).reshape(2, Cout, 1).astype(jnp.float32)

    # Fused conv weights, bf16 for the MXU (f32 accumulation in-kernel).
    #   w1 (HWIO 3,3,Cin,Cout) -> (Cout, 9*Cin), rows scaled by s2 (BN2 fold).
    w1_flat = jnp.transpose(w1.reshape(9, Cin, Cout), (2, 0, 1)).reshape(Cout, 9 * Cin)
    w1_fused = (s2[:, None] * w1_flat).astype(jnp.bfloat16)
    #   w2 (HWIO 3,3,Cout,Cout) -> (Cout, 9*Cout), with w11^T appended so the
    #   shortcut is one extra K-block of the same matmul.
    w2_flat = jnp.transpose(w2.reshape(9, Cout, Cout), (2, 0, 1)).reshape(Cout, 9 * Cout)
    w2_fused = jnp.concatenate([w2_flat, jnp.transpose(w11)], axis=1).astype(jnp.bfloat16)

    # Precomputed 0/1 validity masks for the 9 conv taps, shape (9, 1, HW).
    hh = jnp.arange(H)
    ww = jnp.arange(W)
    masks = []
    for dy in range(3):
        for dx in range(3):
            mh = (hh + dy - 1 >= 0) & (hh + dy - 1 <= H - 1)       # (H,)
            mw = (ww + dx - 1 >= 0) & (ww + dx - 1 <= W - 1)       # (W,)
            masks.append((mh[:, None] & mw[None, :]).reshape(HW))
    tap_masks = jnp.stack(masks).astype(jnp.float32).reshape(9, 1, HW)

    def fixed(shape):
        k = len(shape)
        return pl.BlockSpec(shape, lambda n, _k=k: (0,) * _k)

    kernel = functools.partial(_wrn_block_kernel, W)

    out = pl.pallas_call(
        kernel,
        out_shape=jax.ShapeDtypeStruct((N, Cout, HW), jnp.float32),
        grid=(N,),
        in_specs=[
            pl.BlockSpec((1, Cin, HW), lambda n: (n, 0, 0)),       # x
            fixed((9, 1, HW)),                                     # tap masks
            fixed((2, Cin, 1)),                                    # BN1 scale/shift
            fixed((Cout, 9 * Cin)),                                # fused conv1 weights
            fixed((2, Cout, 1)),                                   # shift1 / merged bias
            fixed((Cout, 9 * Cout + Cin)),                         # fused conv2+shortcut weights
        ],
        out_specs=pl.BlockSpec((1, Cout, HW), lambda n: (n, 0, 0)),
        scratch_shapes=[
            pltpu.VMEM((9 * Cin, HW), jnp.bfloat16),               # conv1 staging slab
            pltpu.VMEM((9 * Cout + Cin, HW), jnp.bfloat16),        # conv2+shortcut slab
        ],
        compiler_params=pltpu.CompilerParams(
            dimension_semantics=("parallel",)),
    )(x, tap_masks, bn1, w1_fused, ocp, w2_fused)

    return out.reshape(N, Cout, H, W)                              # already NCHW


def ref_forward(x_nchw, params):
    """Plain-JAX reference (same math, XLA convs, f32) for a correctness check."""
    s1, t1, w1, b1, s2, t2, w2, b2, w11, b11 = params
    x = jnp.transpose(x_nchw, (0, 2, 3, 1)).astype(jnp.float32)
    dn = ('NHWC', 'HWIO', 'NHWC')
    hp = lax.Precision.HIGHEST

    a1 = jnp.maximum(x * s1 + t1, 0.0)
    y1 = lax.conv_general_dilated(a1, w1, (1, 1), 'SAME',
                                  dimension_numbers=dn, precision=hp) + b1
    a2 = jnp.maximum(y1 * s2 + t2, 0.0)
    y2 = lax.conv_general_dilated(a2, w2, (1, 1), 'SAME',
                                  dimension_numbers=dn, precision=hp) + b2
    sc = lax.conv_general_dilated(x, w11.reshape(1, 1, *w11.shape), (1, 1), 'SAME',
                                  dimension_numbers=dn, precision=hp) + b11
    out = y2 + sc
    return jnp.transpose(out, (0, 3, 1, 2))


if __name__ == "__main__":
    N, Cin, Cout, H, W = 2, 4, 8, 16, 16

    key = jax.random.PRNGKey(0)
    ks = jax.random.split(key, 16)

    x = jax.random.normal(ks[0], (N, Cin, H, W), jnp.float32)      # NCHW input

    def bn_params(kg, kb, km, kv, C):
        gamma = 1.0 + 0.1 * jax.random.normal(kg, (C,), jnp.float32)
        beta = 0.1 * jax.random.normal(kb, (C,), jnp.float32)
        mean = 0.1 * jax.random.normal(km, (C,), jnp.float32)
        var = jax.random.uniform(kv, (C,), jnp.float32, minval=0.5, maxval=1.5)
        scale = gamma * lax.rsqrt(var + 1e-5)
        shift = beta - mean * scale
        return scale, shift

    s1, t1 = bn_params(ks[1], ks[2], ks[3], ks[4], Cin)
    s2, t2 = bn_params(ks[5], ks[6], ks[7], ks[8], Cout)
    w1 = 0.2 * jax.random.normal(ks[9], (3, 3, Cin, Cout), jnp.float32)    # HWIO
    b1 = 0.1 * jax.random.normal(ks[10], (Cout,), jnp.float32)
    w2 = 0.2 * jax.random.normal(ks[11], (3, 3, Cout, Cout), jnp.float32)  # HWIO
    b2 = 0.1 * jax.random.normal(ks[12], (Cout,), jnp.float32)
    w11 = 0.2 * jax.random.normal(ks[13], (Cin, Cout), jnp.float32)
    b11 = 0.1 * jax.random.normal(ks[14], (Cout,), jnp.float32)

    params = (s1, t1, w1, b1, s2, t2, w2, b2, w11, b11)

    out = wrn_block_forward(x, params)
    out = jax.block_until_ready(out)

    assert out.shape == (N, Cout, H, W), out.shape

    ref = jax.block_until_ready(ref_forward(x, params))
    # bf16 matmul operands (f32 accumulation) vs an f32 HIGHEST-precision
    # reference: tolerance loosened accordingly.
    max_err = float(jnp.max(jnp.abs(out - ref)))
    if not jnp.allclose(out, ref, atol=1e-1, rtol=5e-2):
        raise AssertionError(f"Pallas kernel mismatch vs reference, max |err| = {max_err}")

    print("KERNEL_OK")
</pallas_src>

<mosaic_0001>
module attributes {stable_mosaic.version = 11 : i64} {
  func.func @_wrn_block_kernel(%arg0: i32, %arg1: memref<1x4x256xf32, #tpu.memory_space<vmem>>, %arg2: memref<9x1x256xf32, #tpu.memory_space<vmem>>, %arg3: memref<2x4x1xf32, #tpu.memory_space<vmem>>, %arg4: memref<8x36xbf16, #tpu.memory_space<vmem>>, %arg5: memref<2x8x1xf32, #tpu.memory_space<vmem>>, %arg6: memref<8x76xbf16, #tpu.memory_space<vmem>>, %arg7: memref<1x8x256xf32, #tpu.memory_space<vmem>>, %arg8: memref<36x256xbf16, #tpu.memory_space<vmem>>, %arg9: memref<76x256xbf16, #tpu.memory_space<vmem>>) attributes {dimension_semantics = [#tpu.dimension_semantics<parallel>], iteration_bounds = array<i64: 2>, scalar_prefetch = 0 : i64, scratch_operands = 2 : i64, tpu.core_type = #tpu.core_type<tc>, window_params = [{transform_indices = @transform_0, window_bounds = array<i64: 1, 4, 256>}, {pipeline_mode = #tpu.pipeline_mode<synchronous>, transform_indices = @transform_1, window_bounds = array<i64: 9, 1, 256>}, {pipeline_mode = #tpu.pipeline_mode<synchronous>, transform_indices = @transform_2, window_bounds = array<i64: 2, 4, 1>}, {pipeline_mode = #tpu.pipeline_mode<synchronous>, transform_indices = @transform_3, window_bounds = array<i64: 8, 36>}, {pipeline_mode = #tpu.pipeline_mode<synchronous>, transform_indices = @transform_4, window_bounds = array<i64: 2, 8, 1>}, {pipeline_mode = #tpu.pipeline_mode<synchronous>, transform_indices = @transform_5, window_bounds = array<i64: 8, 76>}, {transform_indices = @transform_6, window_bounds = array<i64: 1, 8, 256>}]} {
    %c0 = arith.constant 0 : index
    %c0_0 = arith.constant 0 : index
    %c0_1 = arith.constant 0 : index
    %0 = vector.load %arg1[%c0, %c0_0, %c0_1] : memref<1x4x256xf32, #tpu.memory_space<vmem>>, vector<1x4x256xf32>
    %1 = vector.shape_cast %0 : vector<1x4x256xf32> to vector<4x256xf32>
    %c0_2 = arith.constant 0 : index
    %c0_3 = arith.constant 0 : index
    %c0_4 = arith.constant 0 : index
    %2 = vector.load %arg3[%c0_2, %c0_3, %c0_4] : memref<2x4x1xf32, #tpu.memory_space<vmem>>, vector<1x4x1xf32>
    %3 = vector.shape_cast %2 : vector<1x4x1xf32> to vector<4x1xf32>
    %4 = vector.broadcast %3 : vector<4x1xf32> to vector<4x256xf32>
    %5 = arith.mulf %1, %4 : vector<4x256xf32>
    %c1 = arith.constant 1 : index
    %c0_5 = arith.constant 0 : index
    %c0_6 = arith.constant 0 : index
    %6 = vector.load %arg3[%c1, %c0_5, %c0_6] : memref<2x4x1xf32, #tpu.memory_space<vmem>>, vector<1x4x1xf32>
    %7 = vector.shape_cast %6 : vector<1x4x1xf32> to vector<4x1xf32>
    %8 = vector.broadcast %7 : vector<4x1xf32> to vector<4x256xf32>
    %9 = arith.addf %5, %8 : vector<4x256xf32>
    %cst = arith.constant 0.000000e+00 : f32
    %10 = vector.broadcast %cst : f32 to vector<4x256xf32>
    %11 = arith.maximumf %9, %10 : vector<4x256xf32>
    %c17_i32 = arith.constant 17 : i32
    %12 = tpu.dynamic_rotate %11 by %c17_i32 dim 1 : vector<4x256xf32>, i32 -> vector<4x256xf32>
    %c0_7 = arith.constant 0 : index
    %c0_8 = arith.constant 0 : index
    %c0_9 = arith.constant 0 : index
    %13 = vector.load %arg2[%c0_7, %c0_8, %c0_9] : memref<9x1x256xf32, #tpu.memory_space<vmem>>, vector<1x1x256xf32>
    %14 = vector.shape_cast %13 : vector<1x1x256xf32> to vector<1x256xf32>
    %15 = vector.broadcast %14 : vector<1x256xf32> to vector<4x256xf32>
    %16 = arith.mulf %12, %15 : vector<4x256xf32>
    %17 = arith.truncf %16 : vector<4x256xf32> to vector<4x256xbf16>
    %c0_10 = arith.constant 0 : index
    %c0_11 = arith.constant 0 : index
    %18 = vector.load %arg8[%c0_10, %c0_11] : memref<36x256xbf16, #tpu.memory_space<vmem>>, vector<4x256xbf16>
    tpu.vector_store %arg8[%c0_10, %c0_11], %17 {strides = array<i32>} : memref<36x256xbf16, #tpu.memory_space<vmem>>, vector<4x256xbf16>,
    %c16_i32 = arith.constant 16 : i32
    %19 = tpu.dynamic_rotate %11 by %c16_i32 dim 1 : vector<4x256xf32>, i32 -> vector<4x256xf32>
    %c1_12 = arith.constant 1 : index
    %c0_13 = arith.constant 0 : index
    %c0_14 = arith.constant 0 : index
    %20 = vector.load %arg2[%c1_12, %c0_13, %c0_14] : memref<9x1x256xf32, #tpu.memory_space<vmem>>, vector<1x1x256xf32>
    %21 = vector.shape_cast %20 : vector<1x1x256xf32> to vector<1x256xf32>
    %22 = vector.broadcast %21 : vector<1x256xf32> to vector<4x256xf32>
    %23 = arith.mulf %19, %22 : vector<4x256xf32>
    %24 = arith.truncf %23 : vector<4x256xf32> to vector<4x256xbf16>
    %c4 = arith.constant 4 : index
    %c0_15 = arith.constant 0 : index
    %25 = vector.load %arg8[%c4, %c0_15] : memref<36x256xbf16, #tpu.memory_space<vmem>>, vector<4x256xbf16>
    tpu.vector_store %arg8[%c4, %c0_15], %24 {strides = array<i32>} : memref<36x256xbf16, #tpu.memory_space<vmem>>, vector<4x256xbf16>,
    %c15_i32 = arith.constant 15 : i32
    %26 = tpu.dynamic_rotate %11 by %c15_i32 dim 1 : vector<4x256xf32>, i32 -> vector<4x256xf32>
    %c2 = arith.constant 2 : index
    %c0_16 = arith.constant 0 : index
    %c0_17 = arith.constant 0 : index
    %27 = vector.load %arg2[%c2, %c0_16, %c0_17] : memref<9x1x256xf32, #tpu.memory_space<vmem>>, vector<1x1x256xf32>
    %28 = vector.shape_cast %27 : vector<1x1x256xf32> to vector<1x256xf32>
    %29 = vector.broadcast %28 : vector<1x256xf32> to vector<4x256xf32>
    %30 = arith.mulf %26, %29 : vector<4x256xf32>
    %31 = arith.truncf %30 : vector<4x256xf32> to vector<4x256xbf16>
    %c8 = arith.constant 8 : index
    %c0_18 = arith.constant 0 : index
    %32 = vector.load %arg8[%c8, %c0_18] : memref<36x256xbf16, #tpu.memory_space<vmem>>, vector<4x256xbf16>
    tpu.vector_store %arg8[%c8, %c0_18], %31 {strides = array<i32>} : memref<36x256xbf16, #tpu.memory_space<vmem>>, vector<4x256xbf16>,
    %c1_i32 = arith.constant 1 : i32
    %33 = tpu.dynamic_rotate %11 by %c1_i32 dim 1 : vector<4x256xf32>, i32 -> vector<4x256xf32>
    %c3 = arith.constant 3 : index
    %c0_19 = arith.constant 0 : index
    %c0_20 = arith.constant 0 : index
    %34 = vector.load %arg2[%c3, %c0_19, %c0_20] : memref<9x1x256xf32, #tpu.memory_space<vmem>>, vector<1x1x256xf32>
    %35 = vector.shape_cast %34 : vector<1x1x256xf32> to vector<1x256xf32>
    %36 = vector.broadcast %35 : vector<1x256xf32> to vector<4x256xf32>
    %37 = arith.mulf %33, %36 : vector<4x256xf32>
    %38 = arith.truncf %37 : vector<4x256xf32> to vector<4x256xbf16>
    %c12 = arith.constant 12 : index
    %c0_21 = arith.constant 0 : index
    %39 = vector.load %arg8[%c12, %c0_21] : memref<36x256xbf16, #tpu.memory_space<vmem>>, vector<4x256xbf16>
    tpu.vector_store %arg8[%c12, %c0_21], %38 {strides = array<i32>} : memref<36x256xbf16, #tpu.memory_space<vmem>>, vector<4x256xbf16>,
    %40 = arith.truncf %11 : vector<4x256xf32> to vector<4x256xbf16>
    %c16 = arith.constant 16 : index
    %c0_22 = arith.constant 0 : index
    %41 = vector.load %arg8[%c16, %c0_22] : memref<36x256xbf16, #tpu.memory_space<vmem>>, vector<4x256xbf16>
    tpu.vector_store %arg8[%c16, %c0_22], %40 {strides = array<i32>} : memref<36x256xbf16, #tpu.memory_space<vmem>>, vector<4x256xbf16>,
    %c255_i32 = arith.constant 255 : i32
    %42 = tpu.dynamic_rotate %11 by %c255_i32 dim 1 : vector<4x256xf32>, i32 -> vector<4x256xf32>
    %c5 = arith.constant 5 : index
    %c0_23 = arith.constant 0 : index
    %c0_24 = arith.constant 0 : index
    %43 = vector.load %arg2[%c5, %c0_23, %c0_24] : memref<9x1x256xf32, #tpu.memory_space<vmem>>, vector<1x1x256xf32>
    %44 = vector.shape_cast %43 : vector<1x1x256xf32> to vector<1x256xf32>
    %45 = vector.broadcast %44 : vector<1x256xf32> to vector<4x256xf32>
    %46 = arith.mulf %42, %45 : vector<4x256xf32>
    %47 = arith.truncf %46 : vector<4x256xf32> to vector<4x256xbf16>
    %c20 = arith.constant 20 : index
    %c0_25 = arith.constant 0 : index
    %48 = vector.load %arg8[%c20, %c0_25] : memref<36x256xbf16, #tpu.memory_space<vmem>>, vector<4x256xbf16>
    tpu.vector_store %arg8[%c20, %c0_25], %47 {strides = array<i32>} : memref<36x256xbf16, #tpu.memory_space<vmem>>, vector<4x256xbf16>,
    %c241_i32 = arith.constant 241 : i32
    %49 = tpu.dynamic_rotate %11 by %c241_i32 dim 1 : vector<4x256xf32>, i32 -> vector<4x256xf32>
    %c6 = arith.constant 6 : index
    %c0_26 = arith.constant 0 : index
    %c0_27 = arith.constant 0 : index
    %50 = vector.load %arg2[%c6, %c0_26, %c0_27] : memref<9x1x256xf32, #tpu.memory_space<vmem>>, vector<1x1x256xf32>
    %51 = vector.shape_cast %50 : vector<1x1x256xf32> to vector<1x256xf32>
    %52 = vector.broadcast %51 : vector<1x256xf32> to vector<4x256xf32>
    %53 = arith.mulf %49, %52 : vector<4x256xf32>
    %54 = arith.truncf %53 : vector<4x256xf32> to vector<4x256xbf16>
    %c24 = arith.constant 24 : index
    %c0_28 = arith.constant 0 : index
    %55 = vector.load %arg8[%c24, %c0_28] : memref<36x256xbf16, #tpu.memory_space<vmem>>, vector<4x256xbf16>
    tpu.vector_store %arg8[%c24, %c0_28], %54 {strides = array<i32>} : memref<36x256xbf16, #tpu.memory_space<vmem>>, vector<4x256xbf16>,
    %c240_i32 = arith.constant 240 : i32
    %56 = tpu.dynamic_rotate %11 by %c240_i32 dim 1 : vector<4x256xf32>, i32 -> vector<4x256xf32>
    %c7 = arith.constant 7 : index
    %c0_29 = arith.constant 0 : index
    %c0_30 = arith.constant 0 : index
    %57 = vector.load %arg2[%c7, %c0_29, %c0_30] : memref<9x1x256xf32, #tpu.memory_space<vmem>>, vector<1x1x256xf32>
    %58 = vector.shape_cast %57 : vector<1x1x256xf32> to vector<1x256xf32>
    %59 = vector.broadcast %58 : vector<1x256xf32> to vector<4x256xf32>
    %60 = arith.mulf %56, %59 : vector<4x256xf32>
    %61 = arith.truncf %60 : vector<4x256xf32> to vector<4x256xbf16>
    %c28 = arith.constant 28 : index
    %c0_31 = arith.constant 0 : index
    %62 = vector.load %arg8[%c28, %c0_31] : memref<36x256xbf16, #tpu.memory_space<vmem>>, vector<4x256xbf16>
    tpu.vector_store %arg8[%c28, %c0_31], %61 {strides = array<i32>} : memref<36x256xbf16, #tpu.memory_space<vmem>>, vector<4x256xbf16>,
    %c239_i32 = arith.constant 239 : i32
    %63 = tpu.dynamic_rotate %11 by %c239_i32 dim 1 : vector<4x256xf32>, i32 -> vector<4x256xf32>
    %c8_32 = arith.constant 8 : index
    %c0_33 = arith.constant 0 : index
    %c0_34 = arith.constant 0 : index
    %64 = vector.load %arg2[%c8_32, %c0_33, %c0_34] : memref<9x1x256xf32, #tpu.memory_space<vmem>>, vector<1x1x256xf32>
    %65 = vector.shape_cast %64 : vector<1x1x256xf32> to vector<1x256xf32>
    %66 = vector.broadcast %65 : vector<1x256xf32> to vector<4x256xf32>
    %67 = arith.mulf %63, %66 : vector<4x256xf32>
    %68 = arith.truncf %67 : vector<4x256xf32> to vector<4x256xbf16>
    %c32 = arith.constant 32 : index
    %c0_35 = arith.constant 0 : index
    %69 = vector.load %arg8[%c32, %c0_35] : memref<36x256xbf16, #tpu.memory_space<vmem>>, vector<4x256xbf16>
    tpu.vector_store %arg8[%c32, %c0_35], %68 {strides = array<i32>} : memref<36x256xbf16, #tpu.memory_space<vmem>>, vector<4x256xbf16>,
    %c0_36 = arith.constant 0 : index
    %c0_37 = arith.constant 0 : index
    %70 = vector.load %arg4[%c0_36, %c0_37] : memref<8x36xbf16, #tpu.memory_space<vmem>>, vector<8x36xbf16>
    %c0_38 = arith.constant 0 : index
    %c0_39 = arith.constant 0 : index
    %71 = vector.load %arg8[%c0_38, %c0_39] : memref<36x256xbf16, #tpu.memory_space<vmem>>, vector<36x256xbf16>
    %cst_40 = arith.constant dense<0.000000e+00> : vector<8x256xf32>
    %72 = tpu.matmul %70, %71, %cst_40 {dimension_numbers = #tpu.dot_dimension_numbers<[1], [0], [0], [1], [0, 0, 1, 1], [], []>} : vector<8x36xbf16>, vector<36x256xbf16>, vector<8x256xf32> -> vector<8x256xf32>
    %c0_41 = arith.constant 0 : index
    %c0_42 = arith.constant 0 : index
    %c0_43 = arith.constant 0 : index
    %73 = vector.load %arg5[%c0_41, %c0_42, %c0_43] : memref<2x8x1xf32, #tpu.memory_space<vmem>>, vector<1x8x1xf32>
    %74 = vector.shape_cast %73 : vector<1x8x1xf32> to vector<8x1xf32>
    %75 = vector.broadcast %74 : vector<8x1xf32> to vector<8x256xf32>
    %76 = arith.addf %72, %75 : vector<8x256xf32>
    %cst_44 = arith.constant 0.000000e+00 : f32
    %77 = vector.broadcast %cst_44 : f32 to vector<8x256xf32>
    %78 = arith.maximumf %76, %77 : vector<8x256xf32>
    %c17_i32_45 = arith.constant 17 : i32
    %79 = tpu.dynamic_rotate %78 by %c17_i32_45 dim 1 : vector<8x256xf32>, i32 -> vector<8x256xf32>
    %c0_46 = arith.constant 0 : index
    %c0_47 = arith.constant 0 : index
    %c0_48 = arith.constant 0 : index
    %80 = vector.load %arg2[%c0_46, %c0_47, %c0_48] : memref<9x1x256xf32, #tpu.memory_space<vmem>>, vector<1x1x256xf32>
    %81 = vector.shape_cast %80 : vector<1x1x256xf32> to vector<1x256xf32>
    %82 = vector.broadcast %81 : vector<1x256xf32> to vector<8x256xf32>
    %83 = arith.mulf %79, %82 : vector<8x256xf32>
    %84 = arith.truncf %83 : vector<8x256xf32> to vector<8x256xbf16>
    %c0_49 = arith.constant 0 : index
    %c0_50 = arith.constant 0 : index
    %85 = vector.load %arg9[%c0_49, %c0_50] : memref<76x256xbf16, #tpu.memory_space<vmem>>, vector<8x256xbf16>
    tpu.vector_store %arg9[%c0_49, %c0_50], %84 {strides = array<i32>} : memref<76x256xbf16, #tpu.memory_space<vmem>>, vector<8x256xbf16>,
    %c16_i32_51 = arith.constant 16 : i32
    %86 = tpu.dynamic_rotate %78 by %c16_i32_51 dim 1 : vector<8x256xf32>, i32 -> vector<8x256xf32>
    %c1_52 = arith.constant 1 : index
    %c0_53 = arith.constant 0 : index
    %c0_54 = arith.constant 0 : index
    %87 = vector.load %arg2[%c1_52, %c0_53, %c0_54] : memref<9x1x256xf32, #tpu.memory_space<vmem>>, vector<1x1x256xf32>
    %88 = vector.shape_cast %87 : vector<1x1x256xf32> to vector<1x256xf32>
    %89 = vector.broadcast %88 : vector<1x256xf32> to vector<8x256xf32>
    %90 = arith.mulf %86, %89 : vector<8x256xf32>
    %91 = arith.truncf %90 : vector<8x256xf32> to vector<8x256xbf16>
    %c8_55 = arith.constant 8 : index
    %c0_56 = arith.constant 0 : index
    %92 = vector.load %arg9[%c8_55, %c0_56] : memref<76x256xbf16, #tpu.memory_space<vmem>>, vector<8x256xbf16>
    tpu.vector_store %arg9[%c8_55, %c0_56], %91 {strides = array<i32>} : memref<76x256xbf16, #tpu.memory_space<vmem>>, vector<8x256xbf16>,
    %c15_i32_57 = arith.constant 15 : i32
    %93 = tpu.dynamic_rotate %78 by %c15_i32_57 dim 1 : vector<8x256xf32>, i32 -> vector<8x256xf32>
    %c2_58 = arith.constant 2 : index
    %c0_59 = arith.constant 0 : index
    %c0_60 = arith.constant 0 : index
    %94 = vector.load %arg2[%c2_58, %c0_59, %c0_60] : memref<9x1x256xf32, #tpu.memory_space<vmem>>, vector<1x1x256xf32>
    %95 = vector.shape_cast %94 : vector<1x1x256xf32> to vector<1x256xf32>
    %96 = vector.broadcast %95 : vector<1x256xf32> to vector<8x256xf32>
    %97 = arith.mulf %93, %96 : vector<8x256xf32>
    %98 = arith.truncf %97 : vector<8x256xf32> to vector<8x256xbf16>
    %c16_61 = arith.constant 16 : index
    %c0_62 = arith.constant 0 : index
    %99 = vector.load %arg9[%c16_61, %c0_62] : memref<76x256xbf16, #tpu.memory_space<vmem>>, vector<8x256xbf16>
    tpu.vector_store %arg9[%c16_61, %c0_62], %98 {strides = array<i32>} : memref<76x256xbf16, #tpu.memory_space<vmem>>, vector<8x256xbf16>,
    %c1_i32_63 = arith.constant 1 : i32
    %100 = tpu.dynamic_rotate %78 by %c1_i32_63 dim 1 : vector<8x256xf32>, i32 -> vector<8x256xf32>
    %c3_64 = arith.constant 3 : index
    %c0_65 = arith.constant 0 : index
    %c0_66 = arith.constant 0 : index
    %101 = vector.load %arg2[%c3_64, %c0_65, %c0_66] : memref<9x1x256xf32, #tpu.memory_space<vmem>>, vector<1x1x256xf32>
    %102 = vector.shape_cast %101 : vector<1x1x256xf32> to vector<1x256xf32>
    %103 = vector.broadcast %102 : vector<1x256xf32> to vector<8x256xf32>
    %104 = arith.mulf %100, %103 : vector<8x256xf32>
    %105 = arith.truncf %104 : vector<8x256xf32> to vector<8x256xbf16>
    %c24_67 = arith.constant 24 : index
    %c0_68 = arith.constant 0 : index
    %106 = vector.load %arg9[%c24_67, %c0_68] : memref<76x256xbf16, #tpu.memory_space<vmem>>, vector<8x256xbf16>
    tpu.vector_store %arg9[%c24_67, %c0_68], %105 {strides = array<i32>} : memref<76x256xbf16, #tpu.memory_space<vmem>>, vector<8x256xbf16>,
    %107 = arith.truncf %78 : vector<8x256xf32> to vector<8x256xbf16>
    %c32_69 = arith.constant 32 : index
    %c0_70 = arith.constant 0 : index
    %108 = vector.load %arg9[%c32_69, %c0_70] : memref<76x256xbf16, #tpu.memory_space<vmem>>, vector<8x256xbf16>
    tpu.vector_store %arg9[%c32_69, %c0_70], %107 {strides = array<i32>} : memref<76x256xbf16, #tpu.memory_space<vmem>>, vector<8x256xbf16>,
    %c255_i32_71 = arith.constant 255 : i32
    %109 = tpu.dynamic_rotate %78 by %c255_i32_71 dim 1 : vector<8x256xf32>, i32 -> vector<8x256xf32>
    %c5_72 = arith.constant 5 : index
    %c0_73 = arith.constant 0 : index
    %c0_74 = arith.constant 0 : index
    %110 = vector.load %arg2[%c5_72, %c0_73, %c0_74] : memref<9x1x256xf32, #tpu.memory_space<vmem>>, vector<1x1x256xf32>
    %111 = vector.shape_cast %110 : vector<1x1x256xf32> to vector<1x256xf32>
    %112 = vector.broadcast %111 : vector<1x256xf32> to vector<8x256xf32>
    %113 = arith.mulf %109, %112 : vector<8x256xf32>
    %114 = arith.truncf %113 : vector<8x256xf32> to vector<8x256xbf16>
    %c40 = arith.constant 40 : index
    %c0_75 = arith.constant 0 : index
    %115 = vector.load %arg9[%c40, %c0_75] : memref<76x256xbf16, #tpu.memory_space<vmem>>, vector<8x256xbf16>
    tpu.vector_store %arg9[%c40, %c0_75], %114 {strides = array<i32>} : memref<76x256xbf16, #tpu.memory_space<vmem>>, vector<8x256xbf16>,
    %c241_i32_76 = arith.constant 241 : i32
    %116 = tpu.dynamic_rotate %78 by %c241_i32_76 dim 1 : vector<8x256xf32>, i32 -> vector<8x256xf32>
    %c6_77 = arith.constant 6 : index
    %c0_78 = arith.constant 0 : index
    %c0_79 = arith.constant 0 : index
    %117 = vector.load %arg2[%c6_77, %c0_78, %c0_79] : memref<9x1x256xf32, #tpu.memory_space<vmem>>, vector<1x1x256xf32>
    %118 = vector.shape_cast %117 : vector<1x1x256xf32> to vector<1x256xf32>
    %119 = vector.broadcast %118 : vector<1x256xf32> to vector<8x256xf32>
    %120 = arith.mulf %116, %119 : vector<8x256xf32>
    %121 = arith.truncf %120 : vector<8x256xf32> to vector<8x256xbf16>
    %c48 = arith.constant 48 : index
    %c0_80 = arith.constant 0 : index
    %122 = vector.load %arg9[%c48, %c0_80] : memref<76x256xbf16, #tpu.memory_space<vmem>>, vector<8x256xbf16>
    tpu.vector_store %arg9[%c48, %c0_80], %121 {strides = array<i32>} : memref<76x256xbf16, #tpu.memory_space<vmem>>, vector<8x256xbf16>,
    %c240_i32_81 = arith.constant 240 : i32
    %123 = tpu.dynamic_rotate %78 by %c240_i32_81 dim 1 : vector<8x256xf32>, i32 -> vector<8x256xf32>
    %c7_82 = arith.constant 7 : index
    %c0_83 = arith.constant 0 : index
    %c0_84 = arith.constant 0 : index
    %124 = vector.load %arg2[%c7_82, %c0_83, %c0_84] : memref<9x1x256xf32, #tpu.memory_space<vmem>>, vector<1x1x256xf32>
    %125 = vector.shape_cast %124 : vector<1x1x256xf32> to vector<1x256xf32>
    %126 = vector.broadcast %125 : vector<1x256xf32> to vector<8x256xf32>
    %127 = arith.mulf %123, %126 : vector<8x256xf32>
    %128 = arith.truncf %127 : vector<8x256xf32> to vector<8x256xbf16>
    %c56 = arith.constant 56 : index
    %c0_85 = arith.constant 0 : index
    %129 = vector.load %arg9[%c56, %c0_85] : memref<76x256xbf16, #tpu.memory_space<vmem>>, vector<8x256xbf16>
    tpu.vector_store %arg9[%c56, %c0_85], %128 {strides = array<i32>} : memref<76x256xbf16, #tpu.memory_space<vmem>>, vector<8x256xbf16>,
    %c239_i32_86 = arith.constant 239 : i32
    %130 = tpu.dynamic_rotate %78 by %c239_i32_86 dim 1 : vector<8x256xf32>, i32 -> vector<8x256xf32>
    %c8_87 = arith.constant 8 : index
    %c0_88 = arith.constant 0 : index
    %c0_89 = arith.constant 0 : index
    %131 = vector.load %arg2[%c8_87, %c0_88, %c0_89] : memref<9x1x256xf32, #tpu.memory_space<vmem>>, vector<1x1x256xf32>
    %132 = vector.shape_cast %131 : vector<1x1x256xf32> to vector<1x256xf32>
    %133 = vector.broadcast %132 : vector<1x256xf32> to vector<8x256xf32>
    %134 = arith.mulf %130, %133 : vector<8x256xf32>
    %135 = arith.truncf %134 : vector<8x256xf32> to vector<8x256xbf16>
    %c64 = arith.constant 64 : index
    %c0_90 = arith.constant 0 : index
    %136 = vector.load %arg9[%c64, %c0_90] : memref<76x256xbf16, #tpu.memory_space<vmem>>, vector<8x256xbf16>
    tpu.vector_store %arg9[%c64, %c0_90], %135 {strides = array<i32>} : memref<76x256xbf16, #tpu.memory_space<vmem>>, vector<8x256xbf16>,
    %137 = arith.truncf %1 : vector<4x256xf32> to vector<4x256xbf16>
    %c72 = arith.constant 72 : index
    %c0_91 = arith.constant 0 : index
    %138 = vector.load %arg9[%c72, %c0_91] : memref<76x256xbf16, #tpu.memory_space<vmem>>, vector<4x256xbf16>
    tpu.vector_store %arg9[%c72, %c0_91], %137 {strides = array<i32>} : memref<76x256xbf16, #tpu.memory_space<vmem>>, vector<4x256xbf16>,
    %c0_92 = arith.constant 0 : index
    %c0_93 = arith.constant 0 : index
    %139 = vector.load %arg6[%c0_92, %c0_93] : memref<8x76xbf16, #tpu.memory_space<vmem>>, vector<8x76xbf16>
    %c0_94 = arith.constant 0 : index
    %c0_95 = arith.constant 0 : index
    %140 = vector.load %arg9[%c0_94, %c0_95] : memref<76x256xbf16, #tpu.memory_space<vmem>>, vector<76x256xbf16>
    %cst_96 = arith.constant dense<0.000000e+00> : vector<8x256xf32>
    %141 = tpu.matmul %139, %140, %cst_96 {dimension_numbers = #tpu.dot_dimension_numbers<[1], [0], [0], [1], [0, 0, 1, 1], [], []>} : vector<8x76xbf16>, vector<76x256xbf16>, vector<8x256xf32> -> vector<8x256xf32>
    %c1_97 = arith.constant 1 : index
    %c0_98 = arith.constant 0 : index
    %c0_99 = arith.constant 0 : index
    %142 = vector.load %arg5[%c1_97, %c0_98, %c0_99] : memref<2x8x1xf32, #tpu.memory_space<vmem>>, vector<1x8x1xf32>
    %143 = vector.shape_cast %142 : vector<1x8x1xf32> to vector<8x1xf32>
    %144 = vector.broadcast %143 : vector<8x1xf32> to vector<8x256xf32>
    %145 = arith.addf %141, %144 : vector<8x256xf32>
    %c0_100 = arith.constant 0 : index
    %c0_101 = arith.constant 0 : index
    %c0_102 = arith.constant 0 : index
    %146 = vector.load %arg7[%c0_100, %c0_101, %c0_102] : memref<1x8x256xf32, #tpu.memory_space<vmem>>, vector<1x8x256xf32>
    %147 = vector.shape_cast %146 : vector<1x8x256xf32> to vector<8x256xf32>
    %148 = vector.shape_cast %145 : vector<8x256xf32> to vector<1x8x256xf32>
    tpu.vector_store %arg7[%c0_100, %c0_101, %c0_102], %148 {strides = array<i32>} : memref<1x8x256xf32, #tpu.memory_space<vmem>>, vector<1x8x256xf32>,
    return
  }
  func.func @transform_0(%arg0: i32) -> (i32, i32, i32) {
    %c0_i32 = arith.constant 0 : i32
    %c0_i32_0 = arith.constant 0 : i32
    %c0_i32_1 = arith.constant 0 : i32
    return %arg0, %c0_i32, %c0_i32_0 : i32, i32, i32
  }
  func.func @transform_1(%arg0: i32) -> (i32, i32, i32) {
    %c0_i32 = arith.constant 0 : i32
    %c0_i32_0 = arith.constant 0 : i32
    %c0_i32_1 = arith.constant 0 : i32
    %c0_i32_2 = arith.constant 0 : i32
    return %c0_i32, %c0_i32_0, %c0_i32_1 : i32, i32, i32
  }
  func.func @transform_2(%arg0: i32) -> (i32, i32, i32) {
    %c0_i32 = arith.constant 0 : i32
    %c0_i32_0 = arith.constant 0 : i32
    %c0_i32_1 = arith.constant 0 : i32
    %c0_i32_2 = arith.constant 0 : i32
    return %c0_i32, %c0_i32_0, %c0_i32_1 : i32, i32, i32
  }
  func.func @transform_3(%arg0: i32) -> (i32, i32) {
    %c0_i32 = arith.constant 0 : i32
    %c0_i32_0 = arith.constant 0 : i32
    %c0_i32_1 = arith.constant 0 : i32
    return %c0_i32, %c0_i32_0 : i32, i32
  }
  func.func @transform_4(%arg0: i32) -> (i32, i32, i32) {
    %c0_i32 = arith.constant 0 : i32
    %c0_i32_0 = arith.constant 0 : i32
    %c0_i32_1 = arith.constant 0 : i32
    %c0_i32_2 = arith.constant 0 : i32
    return %c0_i32, %c0_i32_0, %c0_i32_1 : i32, i32, i32
  }
  func.func @transform_5(%arg0: i32) -> (i32, i32) {
    %c0_i32 = arith.constant 0 : i32
    %c0_i32_0 = arith.constant 0 : i32
    %c0_i32_1 = arith.constant 0 : i32
    return %c0_i32, %c0_i32_0 : i32, i32
  }
  func.func @transform_6(%arg0: i32) -> (i32, i32, i32) {
    %c0_i32 = arith.constant 0 : i32
    %c0_i32_0 = arith.constant 0 : i32
    %c0_i32_1 = arith.constant 0 : i32
    return %arg0, %c0_i32, %c0_i32_0 : i32, i32, i32
  }
}

</mosaic_0001>

<llo_original>
// kernel: tpu_custom_call.1
$region0: #{tpu_custom_call.1}
  #allocation0 [shape = 'u32[]', space=smem, size = 0x4, offset = 0x4, fixed_abs, tag = 'smem constant byte address 0x4 - core index']
  #allocation1 [shape = 'u32[72,128]{1,0:T(1,128)}', space=vmem, size = 0x9000, scoped, tag = 'internal scratch']
  #allocation2 [shape = 'bf16[36,256]{1,0:T(8,128)(2,1)}', space=vmem, size = 0x5000, scoped, tag = 'scratch operand']
  #allocation3 [shape = 'bf16[76,256]{1,0:T(8,128)(2,1)}', space=vmem, size = 0xa000, scoped, tag = 'scratch operand']
  %s0 = inlined_call_operand.hbm [shape: f32[2,4,256], index: 0, kind: input, shape index: {}]
  %s1 = inlined_call_operand.vmem [shape: f32[9,1,256], index: 1, kind: input, shape index: {}]
  %s2 = inlined_call_operand.vmem [shape: f32[2,4,1], index: 2, kind: input, shape index: {}]
  %s3 = inlined_call_operand.vmem [shape: bf16[8,36], index: 3, kind: input, shape index: {}]
  %s4 = inlined_call_operand.vmem [shape: f32[2,8,1], index: 4, kind: input, shape index: {}]
  %s5 = inlined_call_operand.vmem [shape: bf16[8,76], index: 5, kind: input, shape index: {}]
  %s6 = inlined_call_operand.hbm [shape: f32[2,8,256], index: 6, kind: output, shape index: {}]
  %s7 = sld [smem:[#allocation0]]
  $region61: #{tpu_custom_call.1} parent=0
    _
  %s9 = ssub.s32 1, %s7
  %s10 = scalar_select 0, %s9, %s7
  $region1: #{tpu_custom_call.1} parent=0
    #allocation4 [shape = 'u8[8192]{0}', space=vmem, size = 0x2000, scoped, tag = 'input window, operand 0']
    #allocation5 [shape = 's32[2]{0}', space=sflag, size = 0x8, scoped, tag = 'scoped memory for tpu_custom_call.1']
    #allocation6 [shape = 's32[2]{0}', space=sflag, size = 0x8, scoped, tag = 'scoped memory for tpu_custom_call.1']
    #allocation7 [shape = 'u8[16384]{0}', space=vmem, size = 0x4000, scoped, tag = 'output window, operand 0']
    %11 = vsyncpa [#allocation5], 0
    %s12 = scalar_lea.sflag [#allocation5], 1
    %13 = vsyncpa %s12, 0
    %14 = vsyncpa [#allocation6], 0
    %s15 = scalar_lea.sflag [#allocation6], 1
    %16 = vsyncpa %s15, 0
    loop: start=0, step=1, limit=4
    $region2: #{tpu_custom_call.1} parent=1 // loop_pre_header
      _
    $region3: #{tpu_custom_call.1} parent=1 // loop_header
      %s18 = sphi 0, %s22
      %p19 = scmp.ge.s32.totalorder %s18, 4
      %s28 = sphi 0, %s30
      %s31 = sphi 0, %s28
      %s32 = sphi 0, %s31
      %s48 = sphi 0, %s32
      %s52 = sphi 0, %s52
      %s54 = sphi 0, %s52
      %s55 = sphi 0, %s54
      %s69 = sphi 0, %s55
      %s73 = sphi 0, %s73
      %s75 = sphi 0, %s73
      %s76 = sphi 0, %s75
      %s90 = sphi 0, %s76
      %s94 = sphi 0, %s94
      %s96 = sphi 0, %s94
      %s97 = sphi 0, %s96
      %s111 = sphi 0, %s97
      %s115 = sphi 0, %s115
      %s117 = sphi 0, %s115
      %s118 = sphi 0, %s117
      %s132 = sphi 0, %s118
      %s136 = sphi 0, %s136
      %s138 = sphi 0, %s136
      %s139 = sphi 0, %s138
      %s153 = sphi 0, %s139
      %s159 = sphi 0, %s161
      %s162 = sphi 0, %s159
      %s163 = sphi 0, %s162
      %s179 = sphi 0, %s163
    $region4: #{tpu_custom_call.1} parent=1 // loop_header_branch
      %21 = sbr.rel (%p19) target = $region8
    $region5: #{tpu_custom_call.1} parent=1 // loop_body
      %s23 = ssub.s32 %s18, 1
      %s24 = ssub.s32 %s18, 2
      %s25 = sadd.s32 %s18, 1
      %s26 = ssub.s32 %s18, %s25
      %p27 = scmp.eq.s32.totalorder %s26, 0
      %s29 = sadd.s32 %s28, 1
      %s30 = scalar_select %p27, %s28, %s29
      %p33 = pneg %p27
      %p34 = scmp.eq.s32.totalorder %s18, 1
      %p35 = por %p33, %p34
      %p36 = scmp.ne.s32.totalorder %s28, %s31
      %p37 = scmp.eq.s32.totalorder %s18, 0
      %p38 = por %p36, %p37
      %p39 = scmp.ne.s32.totalorder %s28, %s31
      %p40 = scmp.eq.s32.totalorder %s23, 1
      %p41 = por %p39, %p40
      %p42 = scmp.ne.s32.totalorder %s31, %s32
      %p43 = scmp.eq.s32.totalorder %s23, 0
      %p44 = por %p42, %p43
      %p45 = scmp.ne.s32.totalorder %s31, %s32
      %p46 = scmp.eq.s32.totalorder %s24, 1
      %p47 = por %p45, %p46
      %p49 = scmp.ne.s32.totalorder %s32, %s48
      %p50 = scmp.eq.s32.totalorder %s24, 0
      %p51 = por %p49, %p50
      %s53 = sadd.s32 %s52, 1
      %p56 = scmp.eq.s32.totalorder %s18, 1
      %p57 = scmp.ne.s32.totalorder %s52, %s54
      %p58 = scmp.eq.s32.totalorder %s18, 0
      %p59 = por %p57, %p58
      %p60 = scmp.ne.s32.totalorder %s52, %s54
      %p61 = scmp.eq.s32.totalorder %s23, 1
      %p62 = por %p60, %p61
      %p63 = scmp.ne.s32.totalorder %s54, %s55
      %p64 = scmp.eq.s32.totalorder %s23, 0
      %p65 = por %p63, %p64
      %p66 = scmp.ne.s32.totalorder %s54, %s55
      %p67 = scmp.eq.s32.totalorder %s24, 1
      %p68 = por %p66, %p67
      %p70 = scmp.ne.s32.totalorder %s55, %s69
      %p71 = scmp.eq.s32.totalorder %s24, 0
      %p72 = por %p70, %p71
      %s74 = sadd.s32 %s73, 1
      %p77 = scmp.eq.s32.totalorder %s18, 1
      %p78 = scmp.ne.s32.totalorder %s73, %s75
      %p79 = scmp.eq.s32.totalorder %s18, 0
      %p80 = por %p78, %p79
      %p81 = scmp.ne.s32.totalorder %s73, %s75
      %p82 = scmp.eq.s32.totalorder %s23, 1
      %p83 = por %p81, %p82
      %p84 = scmp.ne.s32.totalorder %s75, %s76
      %p85 = scmp.eq.s32.totalorder %s23, 0
      %p86 = por %p84, %p85
      %p87 = scmp.ne.s32.totalorder %s75, %s76
      %p88 = scmp.eq.s32.totalorder %s24, 1
      %p89 = por %p87, %p88
      %p91 = scmp.ne.s32.totalorder %s76, %s90
      %p92 = scmp.eq.s32.totalorder %s24, 0
      %p93 = por %p91, %p92
      %s95 = sadd.s32 %s94, 1
      %p98 = scmp.eq.s32.totalorder %s18, 1
      %p99 = scmp.ne.s32.totalorder %s94, %s96
      %p100 = scmp.eq.s32.totalorder %s18, 0
      %p101 = por %p99, %p100
      %p102 = scmp.ne.s32.totalorder %s94, %s96
      %p103 = scmp.eq.s32.totalorder %s23, 1
      %p104 = por %p102, %p103
      %p105 = scmp.ne.s32.totalorder %s96, %s97
      %p106 = scmp.eq.s32.totalorder %s23, 0
      %p107 = por %p105, %p106
      %p108 = scmp.ne.s32.totalorder %s96, %s97
      %p109 = scmp.eq.s32.totalorder %s24, 1
      %p110 = por %p108, %p109
      %p112 = scmp.ne.s32.totalorder %s97, %s111
      %p113 = scmp.eq.s32.totalorder %s24, 0
      %p114 = por %p112, %p113
      %s116 = sadd.s32 %s115, 1
      %p119 = scmp.eq.s32.totalorder %s18, 1
      %p120 = scmp.ne.s32.totalorder %s115, %s117
      %p121 = scmp.eq.s32.totalorder %s18, 0
      %p122 = por %p120, %p121
      %p123 = scmp.ne.s32.totalorder %s115, %s117
      %p124 = scmp.eq.s32.totalorder %s23, 1
      %p125 = por %p123, %p124
      %p126 = scmp.ne.s32.totalorder %s117, %s118
      %p127 = scmp.eq.s32.totalorder %s23, 0
      %p128 = por %p126, %p127
      %p129 = scmp.ne.s32.totalorder %s117, %s118
      %p130 = scmp.eq.s32.totalorder %s24, 1
      %p131 = por %p129, %p130
      %p133 = scmp.ne.s32.totalorder %s118, %s132
      %p134 = scmp.eq.s32.totalorder %s24, 0
      %p135 = por %p133, %p134
      %s137 = sadd.s32 %s136, 1
      %p140 = scmp.eq.s32.totalorder %s18, 1
      %p141 = scmp.ne.s32.totalorder %s136, %s138
      %p142 = scmp.eq.s32.totalorder %s18, 0
      %p143 = por %p141, %p142
      %p144 = scmp.ne.s32.totalorder %s136, %s138
      %p145 = scmp.eq.s32.totalorder %s23, 1
      %p146 = por %p144, %p145
      %p147 = scmp.ne.s32.totalorder %s138, %s139
      %p148 = scmp.eq.s32.totalorder %s23, 0
      %p149 = por %p147, %p148
      %p150 = scmp.ne.s32.totalorder %s138, %s139
      %p151 = scmp.eq.s32.totalorder %s24, 1
      %p152 = por %p150, %p151
      %p154 = scmp.ne.s32.totalorder %s139, %s153
      %p155 = scmp.eq.s32.totalorder %s24, 0
      %p156 = por %p154, %p155
      %s157 = ssub.s32 %s18, %s25
      %p158 = scmp.eq.s32.totalorder %s157, 0
      %s160 = sadd.s32 %s159, 1
      %s161 = scalar_select %p158, %s159, %s160
      %p164 = pneg %p158
      %p165 = scmp.eq.s32.totalorder %s18, 1
      %p166 = por %p164, %p165
      %p167 = scmp.ne.s32.totalorder %s159, %s162
      %p168 = scmp.eq.s32.totalorder %s18, 0
      %p169 = por %p167, %p168
      %p170 = scmp.ne.s32.totalorder %s159, %s162
      %p171 = scmp.eq.s32.totalorder %s23, 1
      %p172 = por %p170, %p171
      %p173 = scmp.ne.s32.totalorder %s162, %s163
      %p174 = scmp.eq.s32.totalorder %s23, 0
      %p175 = por %p173, %p174
      %p176 = scmp.ne.s32.totalorder %s162, %s163
      %p177 = scmp.eq.s32.totalorder %s24, 1
      %p178 = por %p176, %p177
      %p180 = scmp.ne.s32.totalorder %s163, %s179
      %p181 = scmp.eq.s32.totalorder %s24, 0
      %p182 = por %p180, %p181
      %p183 = scmp.le.s32.totalorder 1, %s18
      %p184 = scmp.lt.s32.totalorder %s18, 3
      %p185 = pnand %p183, %p184
      %p186 = pneg %p185
      // Predicated region
      $region9: #{tpu_custom_call.1} parent=5 // pred_check
        _
      $region10: #{tpu_custom_call.1} parent=5 // pred_check_branch
        %188 = sbr.rel (%p185) target = $region12
      $region11: #{tpu_custom_call.1} parent=5 // pred_region
        %s189 = ssub.s32 %s18, 1
        // Predicated region
        $region13: #{tpu_custom_call.1} parent=11 // pred_check
          %p190 = pneg %p65
        $region14: #{tpu_custom_call.1} parent=11 // pred_check_branch
          %192 = sbr.rel (%p190) target = $region16
        $region15: #{tpu_custom_call.1} parent=11 // pred_region
          _
        $region16: #{tpu_custom_call.1} parent=11 // pred_fallthru
          _
        // Predicated region
        $region17: #{tpu_custom_call.1} parent=11 // pred_check
          %p193 = pneg %p86
        $region18: #{tpu_custom_call.1} parent=11 // pred_check_branch
          %195 = sbr.rel (%p193) target = $region20
        $region19: #{tpu_custom_call.1} parent=11 // pred_region
          _
        $region20: #{tpu_custom_call.1} parent=11 // pred_fallthru
          _
        // Predicated region
        $region21: #{tpu_custom_call.1} parent=11 // pred_check
          %p196 = pneg %p107
        $region22: #{tpu_custom_call.1} parent=11 // pred_check_branch
          %198 = sbr.rel (%p196) target = $region24
        $region23: #{tpu_custom_call.1} parent=11 // pred_region
          _
        $region24: #{tpu_custom_call.1} parent=11 // pred_fallthru
          _
        // Predicated region
        $region25: #{tpu_custom_call.1} parent=11 // pred_check
          %p199 = pneg %p128
        $region26: #{tpu_custom_call.1} parent=11 // pred_check_branch
          %201 = sbr.rel (%p199) target = $region28
        $region27: #{tpu_custom_call.1} parent=11 // pred_region
          _
        $region28: #{tpu_custom_call.1} parent=11 // pred_fallthru
          _
        // Predicated region
        $region29: #{tpu_custom_call.1} parent=11 // pred_check
          %p202 = pneg %p149
        $region30: #{tpu_custom_call.1} parent=11 // pred_check_branch
          %204 = sbr.rel (%p202) target = $region32
        $region31: #{tpu_custom_call.1} parent=11 // pred_region
          _
        $region32: #{tpu_custom_call.1} parent=11 // pred_fallthru
          _
      $region12: #{tpu_custom_call.1} parent=5 // pred_fallthru
        _
      %p205 = scmp.lt.s32.totalorder %s18, 2
      // Predicated region
      $region33: #{tpu_custom_call.1} parent=5 // pred_check
        %p206 = pneg %p205
      $region34: #{tpu_custom_call.1} parent=5 // pred_check_branch
        %208 = sbr.rel (%p206) target = $region36
      $region35: #{tpu_custom_call.1} parent=5 // pred_region
        // Predicated region
        $region37: #{tpu_custom_call.1} parent=35 // pred_check
          %p209 = pneg %p38
        $region38: #{tpu_custom_call.1} parent=35 // pred_check_branch
          %211 = sbr.rel (%p209) target = $region40
        $region39: #{tpu_custom_call.1} parent=35 // pred_region
          %s212 = sand.u32 %s28, 1
          %s213 = scalar_lea.sflag [#allocation5], %s212
          %s214 = sand.u32 %s28, 1
          %s215 = smul.addr %s214, 8
          %s216 = scalar_lea.vmem [#allocation4], %s215
          %218 = vsyncadd %s213, 0
          %s219 = smul.addr %s18, 2
          %s220 = smul.addr %s219, 4
          %s221 = scalar_lea.hbm %s0, %s220
          %s223 = sshll.u32 %s221, 4
          %s224 = int_to_ptr.hbm [resolvable:$true] %s223
          %s225 = sshll.u32 %s216, 4
          %s226 = int_to_ptr.vmem [resolvable:$true] %s225
          %228 = dma.hbm_to_vmem [thread:$0]  %s224, 128, %s226, %s213
        $region40: #{tpu_custom_call.1} parent=35 // pred_fallthru
          _
      $region36: #{tpu_custom_call.1} parent=5 // pred_fallthru
        _
      %p229 = scmp.le.s32.totalorder 1, %s18
      %p230 = scmp.lt.s32.totalorder %s18, 3
      %p231 = pnand %p229, %p230
      %p232 = pneg %p231
      // Predicated region
      $region41: #{tpu_custom_call.1} parent=5 // pred_check
        _
      $region42: #{tpu_custom_call.1} parent=5 // pred_check_branch
        %234 = sbr.rel (%p231) target = $region44
      $region43: #{tpu_custom_call.1} parent=5 // pred_region
        %s235 = ssub.s32 %s18, 1
        %s236 = sand.u32 %s31, 1
        %s237 = scalar_lea.sflag [#allocation5], %s236
        %s238 = sand.u32 %s31, 1
        %s239 = smul.addr %s238, 8
        %s240 = scalar_lea.vmem [#allocation4], %s239
        // Predicated region
        $region45: #{tpu_custom_call.1} parent=43 // pred_check
          %p241 = pneg %p44
        $region46: #{tpu_custom_call.1} parent=43 // pred_check_branch
          %243 = sbr.rel (%p241) target = $region48
        $region47: #{tpu_custom_call.1} parent=43 // pred_region
          %245 = dma.done %s237, 128
        $region48: #{tpu_custom_call.1} parent=43 // pred_fallthru
          _
        %s246 = sand.u32 %s31, 1
        %s247 = scalar_lea.sflag [#allocation5], %s246
        %s248 = sand.u32 %s31, 1
        %s249 = smul.addr %s248, 8
        %s250 = scalar_lea.vmem [#allocation4], %s249
        %p251 = pneg %p44
        %p252 = pneg %p41
        %p253 = pneg %p65
        %p254 = pneg %p62
        %p255 = pneg %p86
        %p256 = pneg %p83
        %p257 = pneg %p107
        %p258 = pneg %p104
        %p259 = pneg %p128
        %p260 = pneg %p125
        %p261 = pneg %p149
        %p262 = pneg %p146
        %p263 = pneg %p175
        %p264 = pneg %p172
        %s265 = sand.u32 %s162, 1
        %s266 = scalar_lea.sflag [#allocation6], %s265
        %s267 = sand.u32 %s162, 1
        %s268 = smul.addr %s267, 16
        %s269 = scalar_lea.vmem [#allocation7], %s268
        %v271 = vld [vmem:[%s240] sm:$0xff]
        %v272 = vld [vmem:[%s2] sm:$0xf]
        %274 = vset.pattern.permute.xlu0 0
        %275 = vperm.xlu0 %274, %v272
        %v276 = vpop.permute.xlu0 %275
        %v278 = vunpack.c.l.s4 839922192
        %v279 = vunpack.c.0.s8 %v278
        %v280 = vperm.slane %v276, %v279
        %v282 = vmul.f32 %v271, %v280
        %s283 = scalar_lea.vmem %s2, 4
        %v284 = vld [vmem:[%s283] sm:$0xf]
        %286 = vset.pattern.permute.xlu0 0
        %287 = vperm.xlu0 %286, %v284
        %v288 = vpop.permute.xlu0 %287
        %v290 = vunpack.c.l.s4 839922192
        %v291 = vunpack.c.0.s8 %v290
        %v292 = vperm.slane %v288, %v291
        %v294 = vadd.f32 %v282, %v292
        %v295 = vmax.f32 %v294, 0.0
        %297 = vst [vmem:[#allocation1] ss:$2 sm:$0xff] %v295
        %v298 = vld.sshfl [vmem:[#allocation1] sm:$0xff pattern:$0x75316420]
        %v299 = vld.sshfl [vmem:[#allocation1 + $0x8] sm:$0xff pattern:$0x75316420]
        %302 = vrot.lane.b32.xlu0 %v298, 17
        %v303 = vpop.permute.xlu0 %302
        %304 = vrot.lane.b32.xlu0 %v299, 17
        %v305 = vpop.permute.xlu0 %304
        %v306 = vlaneseq
        %v307 = vand.u32 %v306, 127
        %vm308 = vcmp.lt.s32.totalorder %v307, 17
        %v309 = vsel %vm308, %v303, %v305
        %v310 = vsel %vm308, %v305, %v303
        %v311 = vld [vmem:[%s1] sm:$0x3]
        %v313 = vperm.slane %v311, 0
        %v314 = vperm.slane %v311, 1
        %v317 = vmul.f32 %v310, %v313
        %v318 = vmul.f32 %v309, %v314
        %v319 = vpack.c.bf16 %v318, %v317
        %320 = vst [vmem:[#allocation2] sm:$0x33] %v319
        %321 = vst [vmem:[#allocation1] ss:$2 sm:$0xff] %v295
        %v322 = vld.sshfl [vmem:[#allocation1] sm:$0xff pattern:$0x75316420]
        %v323 = vld.sshfl [vmem:[#allocation1 + $0x8] sm:$0xff pattern:$0x75316420]
        %326 = vrot.lane.b32.xlu0 %v322, 16
        %v327 = vpop.permute.xlu0 %326
        %328 = vrot.lane.b32.xlu0 %v323, 16
        %v329 = vpop.permute.xlu0 %328
        %vm330 = vcmp.lt.s32.totalorder %v307, 16
        %v331 = vsel %vm330, %v327, %v329
        %v332 = vsel %vm330, %v329, %v327
        %s333 = scalar_lea.vmem %s1, 2
        %v334 = vld [vmem:[%s333] sm:$0x3]
        %v336 = vperm.slane %v334, 0
        %v337 = vperm.slane %v334, 1
        %v340 = vmul.f32 %v332, %v336
        %v341 = vmul.f32 %v331, %v337
        %v342 = vpack.c.bf16 %v341, %v340
        %v344 = vrot.slane %v342, 6
        %346 = vst [vmem:[#allocation2] sm:$0xcc] %v344
        %347 = vst [vmem:[#allocation1] ss:$2 sm:$0xff] %v295
        %v348 = vld.sshfl [vmem:[#allocation1] sm:$0xff pattern:$0x75316420]
        %v349 = vld.sshfl [vmem:[#allocation1 + $0x8] sm:$0xff pattern:$0x75316420]
        %352 = vrot.lane.b32.xlu0 %v348, 15
        %v353 = vpop.permute.xlu0 %352
        %354 = vrot.lane.b32.xlu0 %v349, 15
        %v355 = vpop.permute.xlu0 %354
        %vm356 = vcmp.lt.s32.totalorder %v307, 15
        %v357 = vsel %vm356, %v353, %v355
        %v358 = vsel %vm356, %v355, %v353
        %s359 = scalar_lea.vmem %s1, 4
        %v360 = vld [vmem:[%s359] sm:$0x3]
        %v362 = vperm.slane %v360, 0
        %v363 = vperm.slane %v360, 1
        %v366 = vmul.f32 %v358, %v362
        %v367 = vmul.f32 %v357, %v363
        %v368 = vpack.c.bf16 %v367, %v366
        %369 = vst [vmem:[#allocation2 + $0x8] sm:$0x33] %v368
        %370 = vst [vmem:[#allocation1] ss:$2 sm:$0xff] %v295
        %v371 = vld.sshfl [vmem:[#allocation1] sm:$0xff pattern:$0x75316420]
        %v372 = vld.sshfl [vmem:[#allocation1 + $0x8] sm:$0xff pattern:$0x75316420]
        %375 = vrot.lane.b32.xlu0 %v371, 1
        %v376 = vpop.permute.xlu0 %375
        %377 = vrot.lane.b32.xlu0 %v372, 1
        %v378 = vpop.permute.xlu0 %377
        %vm379 = vcmp.lt.s32.totalorder %v307, 1
        %v380 = vsel %vm379, %v376, %v378
        %v381 = vsel %vm379, %v378, %v376
        %s382 = scalar_lea.vmem %s1, 6
        %v383 = vld [vmem:[%s382] sm:$0x3]
        %v385 = vperm.slane %v383, 0
        %v386 = vperm.slane %v383, 1
        %v389 = vmul.f32 %v381, %v385
        %v390 = vmul.f32 %v380, %v386
        %v391 = vpack.c.bf16 %v390, %v389
        %v393 = vrot.slane %v391, 6
        %395 = vst [vmem:[#allocation2 + $0x8] sm:$0xcc] %v393
        %396 = vst [vmem:[#allocation1] ss:$2 sm:$0xff] %v295
        %v397 = vld.sshfl [vmem:[#allocation1] sm:$0xff pattern:$0x75316420]
        %v398 = vld.sshfl [vmem:[#allocation1 + $0x8] sm:$0xff pattern:$0x75316420]
        %v401 = vpack.c.bf16 %v398, %v397
        %402 = vst [vmem:[#allocation2 + $0x10] sm:$0x33] %v401
        %403 = vst [vmem:[#allocation1] ss:$2 sm:$0xff] %v295
        %v404 = vld.sshfl [vmem:[#allocation1] sm:$0xff pattern:$0x75316420]
        %v405 = vld.sshfl [vmem:[#allocation1 + $0x8] sm:$0xff pattern:$0x75316420]
        %408 = vrot.lane.b32.xlu0 %v404, 127
        %v409 = vpop.permute.xlu0 %408
        %410 = vrot.lane.b32.xlu0 %v405, 127
        %v411 = vpop.permute.xlu0 %410
        %vm412 = vcmp.lt.s32.totalorder %v307, 127
        %v413 = vsel %vm412, %v409, %v411
        %v414 = vsel %vm412, %v411, %v409
        %s415 = scalar_lea.vmem %s1, 10
        %v416 = vld [vmem:[%s415] sm:$0x3]
        %v418 = vperm.slane %v416, 0
        %v419 = vperm.slane %v416, 1
        %v422 = vmul.f32 %v413, %v418
        %v423 = vmul.f32 %v414, %v419
        %v424 = vpack.c.bf16 %v423, %v422
        %v426 = vrot.slane %v424, 6
        %428 = vst [vmem:[#allocation2 + $0x10] sm:$0xcc] %v426
        %429 = vst [vmem:[#allocation1] ss:$2 sm:$0xff] %v295
        %v430 = vld.sshfl [vmem:[#allocation1] sm:$0xff pattern:$0x75316420]
        %v431 = vld.sshfl [vmem:[#allocation1 + $0x8] sm:$0xff pattern:$0x75316420]
        %434 = vrot.lane.b32.xlu0 %v430, 113
        %v435 = vpop.permute.xlu0 %434
        %436 = vrot.lane.b32.xlu0 %v431, 113
        %v437 = vpop.permute.xlu0 %436
        %vm438 = vcmp.lt.s32.totalorder %v307, 113
        %v439 = vsel %vm438, %v435, %v437
        %v440 = vsel %vm438, %v437, %v435
        %s441 = scalar_lea.vmem %s1, 12
        %v442 = vld [vmem:[%s441] sm:$0x3]
        %v444 = vperm.slane %v442, 0
        %v445 = vperm.slane %v442, 1
        %v448 = vmul.f32 %v439, %v444
        %v449 = vmul.f32 %v440, %v445
        %v450 = vpack.c.bf16 %v449, %v448
        %451 = vst [vmem:[#allocation2 + $0x18] sm:$0x33] %v450
        %452 = vst [vmem:[#allocation1] ss:$2 sm:$0xff] %v295
        %v453 = vld.sshfl [vmem:[#allocation1] sm:$0xff pattern:$0x75316420]
        %v454 = vld.sshfl [vmem:[#allocation1 + $0x8] sm:$0xff pattern:$0x75316420]
        %457 = vrot.lane.b32.xlu0 %v453, 112
        %v458 = vpop.permute.xlu0 %457
        %459 = vrot.lane.b32.xlu0 %v454, 112
        %v460 = vpop.permute.xlu0 %459
        %vm461 = vcmp.lt.s32.totalorder %v307, 112
        %v462 = vsel %vm461, %v458, %v460
        %v463 = vsel %vm461, %v460, %v458
        %s464 = scalar_lea.vmem %s1, 14
        %v465 = vld [vmem:[%s464] sm:$0x3]
        %v467 = vperm.slane %v465, 0
        %v468 = vperm.slane %v465, 1
        %v471 = vmul.f32 %v462, %v467
        %v472 = vmul.f32 %v463, %v468
        %v473 = vpack.c.bf16 %v472, %v471
        %v475 = vrot.slane %v473, 6
        %477 = vst [vmem:[#allocation2 + $0x18] sm:$0xcc] %v475
        %478 = vst [vmem:[#allocation1] ss:$2 sm:$0xff] %v295
        %v479 = vld.sshfl [vmem:[#allocation1] sm:$0xff pattern:$0x75316420]
        %v480 = vld.sshfl [vmem:[#allocation1 + $0x8] sm:$0xff pattern:$0x75316420]
        %483 = vrot.lane.b32.xlu0 %v479, 111
        %v484 = vpop.permute.xlu0 %483
        %485 = vrot.lane.b32.xlu0 %v480, 111
        %v486 = vpop.permute.xlu0 %485
        %vm487 = vcmp.lt.s32.totalorder %v307, 111
        %v488 = vsel %vm487, %v484, %v486
        %v489 = vsel %vm487, %v486, %v484
        %s490 = scalar_lea.vmem %s1, 16
        %v491 = vld [vmem:[%s490] sm:$0x3]
        %v493 = vperm.slane %v491, 0
        %v494 = vperm.slane %v491, 1
        %v497 = vmul.f32 %v488, %v493
        %v498 = vmul.f32 %v489, %v494
        %v499 = vpack.c.bf16 %v498, %v497
        %500 = vst [vmem:[#allocation2 + $0x20] sm:$0x33] %v499
        %v501 = vld [vmem:[%s3] sm:$0xf]
        %v502 = vld [vmem:[#allocation2] sm:$0xff]
        %v503 = vld [vmem:[#allocation2 + $0x8] sm:$0xff]
        %v504 = vld [vmem:[#allocation2 + $0x10] sm:$0xff]
        %v505 = vld [vmem:[#allocation2 + $0x18] sm:$0xff]
        %v506 = vld [vmem:[#allocation2 + $0x20] sm:$0x33]
        %v507 = vld [vmem:[%s4] sm:$0xff]
        %509 = vset.pattern.permute.xlu0 0
        %510 = vperm.xlu0 %509, %v507
        %v511 = vpop.permute.xlu0 %510
        %v518 = vunpack.c.l.b16 %v502
        %v519 = vunpack.c.h.b16 %v502
        %v520 = vunpack.c.l.b16 %v503
        %v521 = vunpack.c.h.b16 %v503
        %v522 = vunpack.c.l.b16 %v504
        %v523 = vunpack.c.h.b16 %v504
        %v524 = vunpack.c.l.b16 %v505
        %v525 = vunpack.c.h.b16 %v505
        %v526 = vunpack.c.l.b16 %v506
        %v527 = vunpack.c.h.b16 %v506
        %v528 = vpack.c.b16 %v520, %v518
        %v529 = vpack.c.b16 %v521, %v519
        %v530 = vpack.c.b16 %v524, %v522
        %v531 = vpack.c.b16 %v525, %v523
        %v532 = vpack.c.b16 %v526, %v526
        %v533 = vpack.c.b16 %v527, %v527
        %vm538 = vcmask 293888
        %v540 = vsel %vm538, %v501, 0
        %vm542 = vcmask 1041408
        %v544 = vsel %vm542, %v532, 0
        %v547 = vsel %vm542, %v533, 0
        %549 = vmatpush.bf16.msra.mxu0 0
        %550 = vmatpush.bf16.msra.mxu0 0
        %551 = vmatpush.bf16.msra.mxu0 0
        %552 = vmatpush.bf16.msra.mxu0 0
        %553 = vmatpush.bf16.msra.mxu0 0
        %554 = vmatpush.bf16.msra.mxu0 %v544
        %555 = vmatpush.bf16.msra.mxu0 %v530
        %556 = vmatpush.bf16.msra.mxu0 %v528
        %557 = vmatmul.bf16.gmra.mxu0 %v540
        %v558 = vpop.f32.mrf.mxu0
        %v559 = vadd.f32 %v511, %v558
        %v560 = vpop.f32.mrf.mxu0
        %561 = vdwg.mxu0
        %562 = vmatpush.bf16.msra.mxu0 0
        %563 = vmatpush.bf16.msra.mxu0 0
        %564 = vmatpush.bf16.msra.mxu0 0
        %565 = vmatpush.bf16.msra.mxu0 0
        %566 = vmatpush.bf16.msra.mxu0 0
        %567 = vmatpush.bf16.msra.mxu0 %v547
        %568 = vmatpush.bf16.msra.mxu0 %v531
        %569 = vmatpush.bf16.msra.mxu0 %v529
        %570 = vmatmul.bf16.gmra.mxu0 %v540
        %v571 = vpop.f32.mrf.mxu0
        %v572 = vadd.f32 %v511, %v571
        %v573 = vpop.f32.mrf.mxu0
        %574 = vdwg.mxu0
        %v575 = vmax.f32 %v559, 0.0
        %v576 = vmax.f32 %v572, 0.0
        %577 = vrot.lane.b32.xlu0 %v575, 17
        %v578 = vpop.permute.xlu0 %577
        %579 = vrot.lane.b32.xlu0 %v576, 17
        %v580 = vpop.permute.xlu0 %579
        %v581 = vsel %vm308, %v578, %v580
        %v582 = vsel %vm308, %v580, %v578
        %v583 = vld [vmem:[%s1] sm:$0x3]
        %v585 = vperm.slane %v583, 0
        %v586 = vperm.slane %v583, 1
        %v589 = vmul.f32 %v582, %v585
        %v590 = vmul.f32 %v581, %v586
        %v591 = vpack.c.bf16 %v590, %v589
        %592 = vst [vmem:[#allocation3] sm:$0xff] %v591
        %593 = vrot.lane.b32.xlu0 %v575, 16
        %v594 = vpop.permute.xlu0 %593
        %595 = vrot.lane.b32.xlu0 %v576, 16
        %v596 = vpop.permute.xlu0 %595
        %v597 = vsel %vm330, %v594, %v596
        %v598 = vsel %vm330, %v596, %v594
        %v599 = vld [vmem:[%s333] sm:$0x3]
        %v601 = vperm.slane %v599, 0
        %v602 = vperm.slane %v599, 1
        %v605 = vmul.f32 %v598, %v601
        %v606 = vmul.f32 %v597, %v602
        %v607 = vpack.c.bf16 %v606, %v605
        %608 = vst [vmem:[#allocation3 + $0x8] sm:$0xff] %v607
        %609 = vrot.lane.b32.xlu0 %v575, 15
        %v610 = vpop.permute.xlu0 %609
        %611 = vrot.lane.b32.xlu0 %v576, 15
        %v612 = vpop.permute.xlu0 %611
        %v613 = vsel %vm356, %v610, %v612
        %v614 = vsel %vm356, %v612, %v610
        %v615 = vld [vmem:[%s359] sm:$0x3]
        %v617 = vperm.slane %v615, 0
        %v618 = vperm.slane %v615, 1
        %v621 = vmul.f32 %v614, %v617
        %v622 = vmul.f32 %v613, %v618
        %v623 = vpack.c.bf16 %v622, %v621
        %624 = vst [vmem:[#allocation3 + $0x10] sm:$0xff] %v623
        %625 = vrot.lane.b32.xlu0 %v575, 1
        %v626 = vpop.permute.xlu0 %625
        %627 = vrot.lane.b32.xlu0 %v576, 1
        %v628 = vpop.permute.xlu0 %627
        %v629 = vsel %vm379, %v626, %v628
        %v630 = vsel %vm379, %v628, %v626
        %v631 = vld [vmem:[%s382] sm:$0x3]
        %v633 = vperm.slane %v631, 0
        %v634 = vperm.slane %v631, 1
        %v637 = vmul.f32 %v630, %v633
        %v638 = vmul.f32 %v629, %v634
        %v639 = vpack.c.bf16 %v638, %v637
        %640 = vst [vmem:[#allocation3 + $0x18] sm:$0xff] %v639
        %v641 = vpack.c.bf16 %v576, %v575
        %642 = vst [vmem:[#allocation3 + $0x20] sm:$0xff] %v641
        %643 = vrot.lane.b32.xlu0 %v575, 127
        %v644 = vpop.permute.xlu0 %643
        %645 = vrot.lane.b32.xlu0 %v576, 127
        %v646 = vpop.permute.xlu0 %645
        %v647 = vsel %vm412, %v644, %v646
        %v648 = vsel %vm412, %v646, %v644
        %v649 = vld [vmem:[%s415] sm:$0x3]
        %v651 = vperm.slane %v649, 0
        %v652 = vperm.slane %v649, 1
        %v655 = vmul.f32 %v647, %v651
        %v656 = vmul.f32 %v648, %v652
        %v657 = vpack.c.bf16 %v656, %v655
        %658 = vst [vmem:[#allocation3 + $0x28] sm:$0xff] %v657
        %659 = vrot.lane.b32.xlu0 %v575, 113
        %v660 = vpop.permute.xlu0 %659
        %661 = vrot.lane.b32.xlu0 %v576, 113
        %v662 = vpop.permute.xlu0 %661
        %v663 = vsel %vm438, %v660, %v662
        %v664 = vsel %vm438, %v662, %v660
        %v665 = vld [vmem:[%s441] sm:$0x3]
        %v667 = vperm.slane %v665, 0
        %v668 = vperm.slane %v665, 1
        %v671 = vmul.f32 %v663, %v667
        %v672 = vmul.f32 %v664, %v668
        %v673 = vpack.c.bf16 %v672, %v671
        %674 = vst [vmem:[#allocation3 + $0x30] sm:$0xff] %v673
        %675 = vrot.lane.b32.xlu0 %v575, 112
        %v676 = vpop.permute.xlu0 %675
        %677 = vrot.lane.b32.xlu0 %v576, 112
        %v678 = vpop.permute.xlu0 %677
        %v679 = vsel %vm461, %v676, %v678
        %v680 = vsel %vm461, %v678, %v676
        %v681 = vld [vmem:[%s464] sm:$0x3]
        %v683 = vperm.slane %v681, 0
        %v684 = vperm.slane %v681, 1
        %v687 = vmul.f32 %v679, %v683
        %v688 = vmul.f32 %v680, %v684
        %v689 = vpack.c.bf16 %v688, %v687
        %690 = vst [vmem:[#allocation3 + $0x38] sm:$0xff] %v689
        %691 = vrot.lane.b32.xlu0 %v575, 111
        %v692 = vpop.permute.xlu0 %691
        %693 = vrot.lane.b32.xlu0 %v576, 111
        %v694 = vpop.permute.xlu0 %693
        %v695 = vsel %vm487, %v692, %v694
        %v696 = vsel %vm487, %v694, %v692
        %v697 = vld [vmem:[%s490] sm:$0x3]
        %v699 = vperm.slane %v697, 0
        %v700 = vperm.slane %v697, 1
        %v703 = vmul.f32 %v695, %v699
        %v704 = vmul.f32 %v696, %v700
        %v705 = vpack.c.bf16 %v704, %v703
        %706 = vst [vmem:[#allocation3 + $0x40] sm:$0xff] %v705
        %708 = vst [vmem:[#allocation1] ss:$2 sm:$0xff] %v271
        %v709 = vld.sshfl [vmem:[#allocation1] sm:$0xff pattern:$0x75316420]
        %v710 = vld.sshfl [vmem:[#allocation1 + $0x8] sm:$0xff pattern:$0x75316420]
        %v713 = vpack.c.bf16 %v710, %v709
        %714 = vst [vmem:[#allocation3 + $0x48] sm:$0x33] %v713
        %v715 = vld [vmem:[%s5] sm:$0xf]
        %v716 = vld [vmem:[#allocation3] sm:$0xff]
        %v717 = vld [vmem:[#allocation3 + $0x8] sm:$0xff]
        %v718 = vld [vmem:[#allocation3 + $0x10] sm:$0xff]
        %v719 = vld [vmem:[#allocation3 + $0x18] sm:$0xff]
        %v720 = vld [vmem:[#allocation3 + $0x20] sm:$0xff]
        %v721 = vld [vmem:[#allocation3 + $0x28] sm:$0xff]
        %v722 = vld [vmem:[#allocation3 + $0x30] sm:$0xff]
        %v723 = vld [vmem:[#allocation3 + $0x38] sm:$0xff]
        %v724 = vld [vmem:[#allocation3 + $0x40] sm:$0xff]
        %v725 = vld [vmem:[#allocation3 + $0x48] sm:$0x33]
        %s726 = scalar_lea.vmem %s4, 8
        %v727 = vld [vmem:[%s726] sm:$0xff]
        %729 = vset.pattern.permute.xlu0 0
        %730 = vperm.xlu0 %729, %v727
        %v731 = vpop.permute.xlu0 %730
        %v743 = vunpack.c.l.b16 %v716
        %v744 = vunpack.c.h.b16 %v716
        %v745 = vunpack.c.l.b16 %v717
        %v746 = vunpack.c.h.b16 %v717
        %v747 = vunpack.c.l.b16 %v718
        %v748 = vunpack.c.h.b16 %v718
        %v749 = vunpack.c.l.b16 %v719
        %v750 = vunpack.c.h.b16 %v719
        %v751 = vunpack.c.l.b16 %v720
        %v752 = vunpack.c.h.b16 %v720
        %v753 = vunpack.c.l.b16 %v721
        %v754 = vunpack.c.h.b16 %v721
        %v755 = vunpack.c.l.b16 %v722
        %v756 = vunpack.c.h.b16 %v722
        %v757 = vunpack.c.l.b16 %v723
        %v758 = vunpack.c.h.b16 %v723
        %v759 = vunpack.c.l.b16 %v724
        %v760 = vunpack.c.h.b16 %v724
        %v761 = vunpack.c.l.b16 %v725
        %v762 = vunpack.c.h.b16 %v725
        %v763 = vpack.c.b16 %v745, %v743
        %v764 = vpack.c.b16 %v746, %v744
        %v765 = vpack.c.b16 %v749, %v747
        %v766 = vpack.c.b16 %v750, %v748
        %v767 = vpack.c.b16 %v753, %v751
        %v768 = vpack.c.b16 %v754, %v752
        %v769 = vpack.c.b16 %v757, %v755
        %v770 = vpack.c.b16 %v758, %v756
        %v771 = vpack.c.b16 %v761, %v759
        %v772 = vpack.c.b16 %v762, %v760
        %vm781 = vcmask 621568
        %v783 = vsel %vm781, %v715, 0
        %vm785 = vcmask 1045504
        %v787 = vsel %vm785, %v771, 0
        %v790 = vsel %vm785, %v772, 0
        %792 = vmatpush.bf16.msra.mxu0 0
        %793 = vmatpush.bf16.msra.mxu0 0
        %794 = vmatpush.bf16.msra.mxu0 0
        %795 = vmatpush.bf16.msra.mxu0 %v787
        %796 = vmatpush.bf16.msra.mxu0 %v769
        %797 = vmatpush.bf16.msra.mxu0 %v767
        %798 = vmatpush.bf16.msra.mxu0 %v765
        %799 = vmatpush.bf16.msra.mxu0 %v763
        %800 = vmatmul.bf16.gmra.mxu0 %v783
        %v801 = vpop.f32.mrf.mxu0
        %v802 = vadd.f32 %v731, %v801
        %v803 = vpop.f32.mrf.mxu0
        %804 = vdwg.mxu0
        %805 = vmatpush.bf16.msra.mxu0 0
        %806 = vmatpush.bf16.msra.mxu0 0
        %807 = vmatpush.bf16.msra.mxu0 0
        %808 = vmatpush.bf16.msra.mxu0 %v790
        %809 = vmatpush.bf16.msra.mxu0 %v770
        %810 = vmatpush.bf16.msra.mxu0 %v768
        %811 = vmatpush.bf16.msra.mxu0 %v766
        %812 = vmatpush.bf16.msra.mxu0 %v764
        %813 = vmatmul.bf16.gmra.mxu0 %v783
        %v814 = vpop.f32.mrf.mxu0
        %v815 = vadd.f32 %v731, %v814
        %v816 = vpop.f32.mrf.mxu0
        %817 = vdwg.mxu0
        %818 = vst [vmem:[%s269] sm:$0xff] %v802
        %819 = vst [vmem:[%s269 + $0x8] sm:$0xff] %v815
        %s820 = sand.u32 %s162, 1
        %s821 = scalar_lea.sflag [#allocation6], %s820
        %s822 = sand.u32 %s162, 1
        %s823 = smul.addr %s822, 16
        %s824 = scalar_lea.vmem [#allocation7], %s823
        // Predicated region
        $region49: #{tpu_custom_call.1} parent=43 // pred_check
          %p825 = pneg %p172
        $region50: #{tpu_custom_call.1} parent=43 // pred_check_branch
          %827 = sbr.rel (%p825) target = $region52
        $region51: #{tpu_custom_call.1} parent=43 // pred_region
          %829 = vsyncadd %s821, 0
          %s830 = smul.addr %s23, 2
          %s831 = smul.addr %s830, 8
          %s832 = scalar_lea.hbm %s6, %s831
          %s834 = sshll.u32 %s824, 4
          %s835 = int_to_ptr.vmem [resolvable:$true] %s834
          %s836 = sshll.u32 %s832, 4
          %s837 = int_to_ptr.hbm [resolvable:$true] %s836
          %839 = dma.vmem_to_hbm [thread:$0]  %s835, 256, %s837, %s821
        $region52: #{tpu_custom_call.1} parent=43 // pred_fallthru
          _
      $region44: #{tpu_custom_call.1} parent=5 // pred_fallthru
        _
      %p840 = scmp.le.s32.totalorder 2, %s18
      // Predicated region
      $region53: #{tpu_custom_call.1} parent=5 // pred_check
        %p841 = pneg %p840
      $region54: #{tpu_custom_call.1} parent=5 // pred_check_branch
        %843 = sbr.rel (%p841) target = $region56
      $region55: #{tpu_custom_call.1} parent=5 // pred_region
        %s844 = ssub.s32 %s18, 2
        // Predicated region
        $region57: #{tpu_custom_call.1} parent=55 // pred_check
          %p845 = pneg %p178
        $region58: #{tpu_custom_call.1} parent=55 // pred_check_branch
          %847 = sbr.rel (%p845) target = $region60
        $region59: #{tpu_custom_call.1} parent=55 // pred_region
          %s848 = sand.u32 %s163, 1
          %s849 = scalar_lea.sflag [#allocation6], %s848
          %s850 = sand.u32 %s163, 1
          %s851 = smul.addr %s850, 16
          %s852 = scalar_lea.vmem [#allocation7], %s851
          %854 = dma.done %s849, 256
        $region60: #{tpu_custom_call.1} parent=55 // pred_fallthru
          _
      $region56: #{tpu_custom_call.1} parent=5 // pred_fallthru
        _
    $region6: #{tpu_custom_call.1} parent=1 // loop_footer
      %s22 = sadd.s32 1, %s18
    $region7: #{tpu_custom_call.1} parent=1 // loop_footer_branch
      %17 = sbr.rel target = $region3
    $region8: #{tpu_custom_call.1} parent=1 // loop_exit
      _
    %855 = vsyncpa [#allocation5], 1
    %s856 = scalar_lea.sflag [#allocation5], 1
    %857 = vsyncpa %s856, 1
    %858 = vsyncpa [#allocation6], 1
    %s859 = scalar_lea.sflag [#allocation6], 1
    %860 = vsyncpa %s859, 1

</llo_original>
